<compile_context>
chip_gen: v6e
topology: v6e:2x2x1
jax: 0.10.0
libtpu: 0.0.40
codegen_flags: <defaults>
</compile_context>

<pallas_src>
import functools
import math

import jax
import jax.numpy as jnp
from jax.experimental import pallas as pl
from jax.experimental.pallas import tpu as pltpu


def _round_up(x, m):
    return (x + m - 1) // m * m


def _softmax_loss_kernel(rep_a_ref, rep_b_ref, labels_ref, w_ref, bias_ref,
                         out_ref, acc_ref, *,
                         num_rows, tile_rows, inner_steps, num_labels):
    c = pl.program_id(0)   # "parallel" split (megacore on v7x)
    i = pl.program_id(1)   # batch-tile index within this split ("arbitrary")

    @pl.when(i == 0)
    def _init():
        acc_ref[...] = jnp.zeros_like(acc_ref)

    # Stream tiles in their native dtype (bf16 stays bf16 -> half the HBM
    # traffic); MXU accumulation forced to f32 via preferred_element_type.
    a = rep_a_ref[...]                                    # [TB, D]
    b = rep_b_ref[...]                                    # [TB, D]
    diff = jnp.abs(a - b)                                 # [TB, D]

    # logits = cat([a, b, |a-b|], 1) @ W.T + bias, as 3 dots vs packed weights.
    logits = (jnp.dot(a, w_ref[0], preferred_element_type=jnp.float32)
              + jnp.dot(b, w_ref[1], preferred_element_type=jnp.float32)
              + jnp.dot(diff, w_ref[2], preferred_element_type=jnp.float32)
              + bias_ref[...].astype(jnp.float32))        # [TB, L]

    # CrossEntropyLoss pieces (per row), numerically stable, f32.
    m = jnp.max(logits, axis=-1, keepdims=True)
    lse = m + jnp.log(jnp.sum(jnp.exp(logits - m), axis=-1, keepdims=True))

    labels = labels_ref[...]                              # [TB, 1] int32
    class_ids = jax.lax.broadcasted_iota(jnp.int32, (tile_rows, num_labels), 1)
    picked = jnp.sum(jnp.where(class_ids == labels, logits, 0.0),
                     axis=-1, keepdims=True)              # [TB, 1]
    per_row = lse - picked                                # [TB, 1]

    # Mask rows past the true batch size (batch was padded to the grid size).
    row0 = (c * inner_steps + i) * tile_rows
    row_ids = row0 + jax.lax.broadcasted_iota(jnp.int32, (tile_rows, 1), 0)
    per_row = jnp.where(row_ids < num_rows, per_row, 0.0)

    acc_ref[...] += per_row

    @pl.when(i == inner_steps - 1)
    def _finish():
        # Broadcast this split's partial sum into its private (8,128) out block.
        out_ref[...] = jnp.zeros((8, 128), jnp.float32) + jnp.sum(acc_ref[...])


def softmax_loss(rep_a, rep_b, labels, weight, bias, *,
                 tile_rows=None, num_core_splits=2):
    """rep_a, rep_b: [B, D] (f32 or bf16); labels: [B] int; weight: [L, 3*D]
    (nn.Linear layout); bias: [L]. Returns scalar mean cross-entropy loss."""
    B, D = rep_a.shape
    L = weight.shape[0]
    assert weight.shape == (L, 3 * D)
    assert rep_b.shape == (B, D) and labels.shape == (B,)

    if tile_rows is None:
        tile_rows = min(512, _round_up(B, 8))     # >=512-row tiles when B allows
    tile_rows = max(8, _round_up(int(tile_rows), 8))

    nc = max(1, int(num_core_splits))
    total_tiles = pl.cdiv(B, tile_rows)
    inner_steps = pl.cdiv(total_tiles, nc)
    b_pad = nc * inner_steps * tile_rows

    def pad_rows(x):
        return jnp.pad(x, ((0, b_pad - x.shape[0]), (0, 0)))

    rep_a_p = pad_rows(rep_a)
    rep_b_p = pad_rows(rep_b)
    labels_p = pad_rows(labels.reshape(B, 1).astype(jnp.int32))

    # Pack the classifier weight into one resident [3, D, L] array.
    wstack = jnp.stack([weight[:, 0 * D:1 * D].T,
                        weight[:, 1 * D:2 * D].T,
                        weight[:, 2 * D:3 * D].T], axis=0).astype(jnp.float32)
    bias2d = bias.reshape(1, L).astype(jnp.float32)

    rep_spec = pl.BlockSpec((tile_rows, D), lambda c, i: (c * inner_steps + i, 0))
    lab_spec = pl.BlockSpec((tile_rows, 1), lambda c, i: (c * inner_steps + i, 0))
    w_spec = pl.BlockSpec((3, D, L), lambda c, i: (0, 0, 0))
    b_spec = pl.BlockSpec((1, L), lambda c, i: (0, 0))
    out_spec = pl.BlockSpec((8, 128), lambda c, i: (c, 0))

    # VMEM budget estimate (double-buffered streams + resident weights), with
    # headroom; never below the 32 MiB scoped default, never above v7x's 64 MiB.
    itemsize = jnp.dtype(rep_a.dtype).itemsize
    est = (2 * 2 * tile_rows * max(D, 128) * itemsize     # rep_a/rep_b, 2 buffers
           + 2 * 2 * tile_rows * 128 * 4                  # labels (lane padded)
           + 3 * max(D, 8) * 128 * 4 + 8 * 128 * 4        # packed weights + bias
           + tile_rows * 128 * 4 + 2 * 8 * 128 * 4)       # acc scratch + output
    vmem_limit = int(max(32 * 1024 * 1024, min(64 * 1024 * 1024, 2 * est)))

    kernel = functools.partial(_softmax_loss_kernel,
                               num_rows=B, tile_rows=tile_rows,
                               inner_steps=inner_steps, num_labels=L)

    out = pl.pallas_call(
        kernel,
        out_shape=jax.ShapeDtypeStruct((nc * 8, 128), jnp.float32),
        grid=(nc, inner_steps),
        in_specs=[rep_spec, rep_spec, lab_spec, w_spec, b_spec],
        out_specs=out_spec,
        scratch_shapes=[pltpu.VMEM((tile_rows, 1), jnp.float32)],
        compiler_params=pltpu.CompilerParams(
            dimension_semantics=("parallel", "arbitrary"),
            vmem_limit_bytes=vmem_limit),
    )(rep_a_p, rep_b_p, labels_p, wstack, bias2d)

    partials = out[0::8, 0]          # one partial sum per grid split
    return jnp.sum(partials) / B     # CrossEntropyLoss mean reduction


def reference_softmax_loss(rep_a, rep_b, labels, weight, bias):
    feats = jnp.concatenate([rep_a, rep_b, jnp.abs(rep_a - rep_b)], axis=1)
    logits = feats @ weight.T + bias
    logp = jax.nn.log_softmax(logits, axis=-1)
    return -jnp.mean(jnp.take_along_axis(logp, labels[:, None], axis=1))


if __name__ == "__main__":
    B, D, L = 40, 64, 3   # batch, sentence_embedding_dimension, num_labels

    key = jax.random.PRNGKey(0)
    k_a, k_b, k_lab, k_w, k_bias = jax.random.split(key, 5)

    rep_a = jax.random.normal(k_a, (B, D), dtype=jnp.float32)
    rep_b = jax.random.normal(k_b, (B, D), dtype=jnp.float32)
    labels = jax.random.randint(k_lab, (B,), 0, L, dtype=jnp.int32)

    # Deterministic nn.Linear(3*D, L)-style init: U(-1/sqrt(fan_in), 1/sqrt(fan_in))
    fan_in = 3 * D
    bound = 1.0 / math.sqrt(fan_in)
    weight = jax.random.uniform(k_w, (L, 3 * D), jnp.float32, -bound, bound)
    bias = jax.random.uniform(k_bias, (L,), jnp.float32, -bound, bound)

    # Small tile_rows so the demo exercises the batch grid, accumulation over
    # multiple tiles, padded-row masking, and both grid splits. Production use
    # leaves tile_rows=None (auto, >=512-row tiles).
    loss = softmax_loss(rep_a, rep_b, labels, weight, bias, tile_rows=8)
    jax.block_until_ready(loss)

    ref = reference_softmax_loss(rep_a, rep_b, labels, weight, bias)
    assert jnp.allclose(loss, ref, atol=3e-5, rtol=3e-5), (loss, ref)

    print("KERNEL_OK")
</pallas_src>

<mosaic_0001>
module attributes {stable_mosaic.version = 11 : i64} {
  func.func @_softmax_loss_kernel(%arg0: i32, %arg1: i32, %arg2: memref<8x64xf32, #tpu.memory_space<vmem>>, %arg3: memref<8x64xf32, #tpu.memory_space<vmem>>, %arg4: memref<8x1xi32, #tpu.memory_space<vmem>>, %arg5: memref<3x64x3xf32, #tpu.memory_space<vmem>>, %arg6: memref<1x3xf32, #tpu.memory_space<vmem>>, %arg7: memref<8x128xf32, #tpu.memory_space<vmem>>, %arg8: memref<8x1xf32, #tpu.memory_space<vmem>>) attributes {dimension_semantics = [#tpu.dimension_semantics<parallel>, #tpu.dimension_semantics<arbitrary>], iteration_bounds = array<i64: 2, 3>, scalar_prefetch = 0 : i64, scratch_operands = 1 : i64, tpu.core_type = #tpu.core_type<tc>, window_params = [{transform_indices = @transform_0, window_bounds = array<i64: 8, 64>}, {transform_indices = @transform_1, window_bounds = array<i64: 8, 64>}, {transform_indices = @transform_2, window_bounds = array<i64: 8, 1>}, {pipeline_mode = #tpu.pipeline_mode<synchronous>, transform_indices = @transform_3, window_bounds = array<i64: 3, 64, 3>}, {pipeline_mode = #tpu.pipeline_mode<synchronous>, transform_indices = @transform_4, window_bounds = array<i64: 1, 3>}, {transform_indices = @transform_5, window_bounds = array<i64: 8, 128>}]} {
    %c0_i32 = arith.constant 0 : i32
    %0 = arith.cmpi eq, %arg1, %c0_i32 : i32
    %1 = arith.extui %0 : i1 to i32
    %c0_i32_0 = arith.constant 0 : i32
    %2 = arith.cmpi ne, %1, %c0_i32_0 : i32
    scf.if %2 {
      %cst_27 = arith.constant 0.000000e+00 : f32
      %55 = vector.broadcast %cst_27 : f32 to vector<8x1xf32>
      %c0_28 = arith.constant 0 : index
      %c0_29 = arith.constant 0 : index
      %56 = vector.load %arg8[%c0_28, %c0_29] : memref<8x1xf32, #tpu.memory_space<vmem>>, vector<8x1xf32>
      tpu.vector_store %arg8[%c0_28, %c0_29], %55 {strides = array<i32>} : memref<8x1xf32, #tpu.memory_space<vmem>>, vector<8x1xf32>,
    } else {
    }
    %c0 = arith.constant 0 : index
    %c0_1 = arith.constant 0 : index
    %3 = vector.load %arg2[%c0, %c0_1] : memref<8x64xf32, #tpu.memory_space<vmem>>, vector<8x64xf32>
    %c0_2 = arith.constant 0 : index
    %c0_3 = arith.constant 0 : index
    %4 = vector.load %arg3[%c0_2, %c0_3] : memref<8x64xf32, #tpu.memory_space<vmem>>, vector<8x64xf32>
    %5 = arith.subf %3, %4 : vector<8x64xf32>
    %6 = math.absf %5 : vector<8x64xf32>
    %c0_4 = arith.constant 0 : index
    %c0_5 = arith.constant 0 : index
    %c0_6 = arith.constant 0 : index
    %7 = vector.load %arg5[%c0_4, %c0_5, %c0_6] : memref<3x64x3xf32, #tpu.memory_space<vmem>>, vector<1x64x3xf32>
    %8 = vector.shape_cast %7 : vector<1x64x3xf32> to vector<64x3xf32>
    %cst = arith.constant dense<0.000000e+00> : vector<8x3xf32>
    %9 = tpu.matmul %3, %8, %cst {dimension_numbers = #tpu.dot_dimension_numbers<[1], [0], [0], [1], [0, 0, 1, 1], [], []>} : vector<8x64xf32>, vector<64x3xf32>, vector<8x3xf32> -> vector<8x3xf32>
    %c1 = arith.constant 1 : index
    %c0_7 = arith.constant 0 : index
    %c0_8 = arith.constant 0 : index
    %10 = vector.load %arg5[%c1, %c0_7, %c0_8] : memref<3x64x3xf32, #tpu.memory_space<vmem>>, vector<1x64x3xf32>
    %11 = vector.shape_cast %10 : vector<1x64x3xf32> to vector<64x3xf32>
    %cst_9 = arith.constant dense<0.000000e+00> : vector<8x3xf32>
    %12 = tpu.matmul %4, %11, %cst_9 {dimension_numbers = #tpu.dot_dimension_numbers<[1], [0], [0], [1], [0, 0, 1, 1], [], []>} : vector<8x64xf32>, vector<64x3xf32>, vector<8x3xf32> -> vector<8x3xf32>
    %13 = arith.addf %9, %12 : vector<8x3xf32>
    %c2 = arith.constant 2 : index
    %c0_10 = arith.constant 0 : index
    %c0_11 = arith.constant 0 : index
    %14 = vector.load %arg5[%c2, %c0_10, %c0_11] : memref<3x64x3xf32, #tpu.memory_space<vmem>>, vector<1x64x3xf32>
    %15 = vector.shape_cast %14 : vector<1x64x3xf32> to vector<64x3xf32>
    %cst_12 = arith.constant dense<0.000000e+00> : vector<8x3xf32>
    %16 = tpu.matmul %6, %15, %cst_12 {dimension_numbers = #tpu.dot_dimension_numbers<[1], [0], [0], [1], [0, 0, 1, 1], [], []>} : vector<8x64xf32>, vector<64x3xf32>, vector<8x3xf32> -> vector<8x3xf32>
    %17 = arith.addf %13, %16 : vector<8x3xf32>
    %c0_13 = arith.constant 0 : index
    %c0_14 = arith.constant 0 : index
    %18 = vector.load %arg6[%c0_13, %c0_14] : memref<1x3xf32, #tpu.memory_space<vmem>>, vector<1x3xf32>
    %19 = vector.broadcast %18 : vector<1x3xf32> to vector<8x3xf32>
    %20 = arith.addf %17, %19 : vector<8x3xf32>
    %cst_15 = arith.constant dense<0xFF800000> : vector<8xf32>
    %21 = vector.multi_reduction <maximumf>, %20, %cst_15 [1] : vector<8x3xf32> to vector<8xf32>
    %22 = vector.shape_cast %21 : vector<8xf32> to vector<8x1xf32>
    %23 = vector.broadcast %22 : vector<8x1xf32> to vector<8x3xf32>
    %24 = arith.subf %20, %23 : vector<8x3xf32>
    %25 = math.exp %24 : vector<8x3xf32>
    %cst_16 = arith.constant dense<0.000000e+00> : vector<8xf32>
    %26 = vector.multi_reduction <add>, %25, %cst_16 [1] : vector<8x3xf32> to vector<8xf32>
    %27 = vector.shape_cast %26 : vector<8xf32> to vector<8x1xf32>
    %28 = math.log %27 : vector<8x1xf32>
    %29 = arith.addf %22, %28 : vector<8x1xf32>
    %c0_17 = arith.constant 0 : index
    %c0_18 = arith.constant 0 : index
    %30 = vector.load %arg4[%c0_17, %c0_18] : memref<8x1xi32, #tpu.memory_space<vmem>>, vector<8x1xi32>
    %31 = tpu.iota {dimensions = array<i32: 1>} : vector<8x3xi32>
    %32 = vector.broadcast %30 : vector<8x1xi32> to vector<8x3xi32>
    %33 = arith.cmpi eq, %31, %32 : vector<8x3xi32>
    %cst_19 = arith.constant 0.000000e+00 : f32
    %34 = vector.broadcast %cst_19 : f32 to vector<8x3xf32>
    %35 = arith.select %33, %20, %34 : vector<8x3xi1>, vector<8x3xf32>
    %cst_20 = arith.constant dense<0.000000e+00> : vector<8xf32>
    %36 = vector.multi_reduction <add>, %35, %cst_20 [1] : vector<8x3xf32> to vector<8xf32>
    %37 = vector.shape_cast %36 : vector<8xf32> to vector<8x1xf32>
    %38 = arith.subf %29, %37 : vector<8x1xf32>
    %c3_i32 = arith.constant 3 : i32
    %39 = arith.muli %arg0, %c3_i32 : i32
    %40 = arith.addi %39, %arg1 : i32
    %c8_i32 = arith.constant 8 : i32
    %41 = arith.muli %40, %c8_i32 : i32
    %42 = tpu.iota {dimensions = array<i32: 0>} : vector<8x1xi32>
    %43 = vector.broadcast %41 : i32 to vector<8x1xi32>
    %44 = arith.addi %43, %42 : vector<8x1xi32>
    %c40_i32 = arith.constant 40 : i32
    %45 = vector.broadcast %c40_i32 : i32 to vector<8x1xi32>
    %46 = arith.cmpi slt, %44, %45 : vector<8x1xi32>
    %cst_21 = arith.constant 0.000000e+00 : f32
    %47 = vector.broadcast %cst_21 : f32 to vector<8x1xf32>
    %48 = arith.select %46, %38, %47 : vector<8x1xi1>, vector<8x1xf32>
    %c0_22 = arith.constant 0 : index
    %c0_23 = arith.constant 0 : index
    %49 = vector.load %arg8[%c0_22, %c0_23] : memref<8x1xf32, #tpu.memory_space<vmem>>, vector<8x1xf32>
    %50 = arith.addf %49, %48 : vector<8x1xf32>
    %c0_24 = arith.constant 0 : index
    %c0_25 = arith.constant 0 : index
    %51 = vector.load %arg8[%c0_24, %c0_25] : memref<8x1xf32, #tpu.memory_space<vmem>>, vector<8x1xf32>
    tpu.vector_store %arg8[%c0_24, %c0_25], %50 {strides = array<i32>} : memref<8x1xf32, #tpu.memory_space<vmem>>, vector<8x1xf32>,
    %c2_i32 = arith.constant 2 : i32
    %52 = arith.cmpi eq, %arg1, %c2_i32 : i32
    %53 = arith.extui %52 : i1 to i32
    %c0_i32_26 = arith.constant 0 : i32
    %54 = arith.cmpi ne, %53, %c0_i32_26 : i32
    scf.if %54 {
      %cst_27 = arith.constant 0.000000e+00 : f32
      %55 = vector.broadcast %cst_27 : f32 to vector<8x128xf32>
      %c0_28 = arith.constant 0 : index
      %c0_29 = arith.constant 0 : index
      %56 = vector.load %arg8[%c0_28, %c0_29] : memref<8x1xf32, #tpu.memory_space<vmem>>, vector<8x1xf32>
      %57 = vector.shape_cast %56 : vector<8x1xf32> to vector<1x8x1xf32>
      %cst_30 = arith.constant dense<0.000000e+00> : vector<1xf32>
      %58 = vector.multi_reduction <add>, %57, %cst_30 [1, 2] : vector<1x8x1xf32> to vector<1xf32>
      %59 = vector.shape_cast %58 : vector<1xf32> to vector<1x1x1xf32>
      %60 = vector.extract %59[0, 0, 0] : f32 from vector<1x1x1xf32>
      %61 = vector.broadcast %60 : f32 to vector<8x128xf32>
      %62 = arith.addf %55, %61 : vector<8x128xf32>
      %c0_31 = arith.constant 0 : index
      %c0_32 = arith.constant 0 : index
      %63 = vector.load %arg7[%c0_31, %c0_32] : memref<8x128xf32, #tpu.memory_space<vmem>>, vector<8x128xf32>
      tpu.vector_store %arg7[%c0_31, %c0_32], %62 {strides = array<i32>} : memref<8x128xf32, #tpu.memory_space<vmem>>, vector<8x128xf32>,
    } else {
    }
    return
  }
  func.func @transform_0(%arg0: i32, %arg1: i32) -> (i32, i32) {
    %c3_i32 = arith.constant 3 : i32
    %0 = arith.muli %arg0, %c3_i32 : i32
    %1 = arith.addi %0, %arg1 : i32
    %c0_i32 = arith.constant 0 : i32
    %c0_i32_0 = arith.constant 0 : i32
    return %1, %c0_i32 : i32, i32
  }
  func.func @transform_1(%arg0: i32, %arg1: i32) -> (i32, i32) {
    %c3_i32 = arith.constant 3 : i32
    %0 = arith.muli %arg0, %c3_i32 : i32
    %1 = arith.addi %0, %arg1 : i32
    %c0_i32 = arith.constant 0 : i32
    %c0_i32_0 = arith.constant 0 : i32
    return %1, %c0_i32 : i32, i32
  }
  func.func @transform_2(%arg0: i32, %arg1: i32) -> (i32, i32) {
    %c3_i32 = arith.constant 3 : i32
    %0 = arith.muli %arg0, %c3_i32 : i32
    %1 = arith.addi %0, %arg1 : i32
    %c0_i32 = arith.constant 0 : i32
    %c0_i32_0 = arith.constant 0 : i32
    return %1, %c0_i32 : i32, i32
  }
  func.func @transform_3(%arg0: i32, %arg1: i32) -> (i32, i32, i32) {
    %c0_i32 = arith.constant 0 : i32
    %c0_i32_0 = arith.constant 0 : i32
    %c0_i32_1 = arith.constant 0 : i32
    %c0_i32_2 = arith.constant 0 : i32
    return %c0_i32, %c0_i32_0, %c0_i32_1 : i32, i32, i32
  }
  func.func @transform_4(%arg0: i32, %arg1: i32) -> (i32, i32) {
    %c0_i32 = arith.constant 0 : i32
    %c0_i32_0 = arith.constant 0 : i32
    %c0_i32_1 = arith.constant 0 : i32
    return %c0_i32, %c0_i32_0 : i32, i32
  }
  func.func @transform_5(%arg0: i32, %arg1: i32) -> (i32, i32) {
    %c0_i32 = arith.constant 0 : i32
    %c0_i32_0 = arith.constant 0 : i32
    return %arg0, %c0_i32 : i32, i32
  }
}

</mosaic_0001>

<llo_original>
// kernel: tpu_custom_call.1
$region0: #{tpu_custom_call.1}
  #allocation0 [shape = 'u32[]', space=smem, size = 0x4, offset = 0x4, fixed_abs, tag = 'smem constant byte address 0x4 - core index']
  #allocation1 [shape = 'u32[144,128]{1,0:T(1,128)}', space=vmem, size = 0x12000, scoped, tag = 'internal scratch']
  #allocation2 [shape = 'f32[8,1]{1,0:T(8,128)}', space=vmem, size = 0x1000, scoped, tag = 'scratch operand']
  %s0 = inlined_call_operand.vmem [shape: f32[48,64], index: 0, kind: input, shape index: {}]
  %s1 = inlined_call_operand.vmem [shape: f32[48,64], index: 1, kind: input, shape index: {}]
  %s2 = inlined_call_operand.vmem [shape: s32[48,1], index: 2, kind: input, shape index: {}]
  %s3 = inlined_call_operand.vmem [shape: f32[3,64,3], index: 3, kind: input, shape index: {}]
  %s4 = inlined_call_operand.vmem [shape: f32[1,3], index: 4, kind: input, shape index: {}]
  %s5 = inlined_call_operand.hbm [shape: f32[16,128], index: 5, kind: output, shape index: {}]
  %s6 = sld [smem:[#allocation0]]
  $region61: #{tpu_custom_call.1} parent=0
    _
  %s8 = ssub.s32 1, %s6
  %s9 = scalar_select 0, %s8, %s6
  $region1: #{tpu_custom_call.1} parent=0
    #allocation3 [shape = 'u8[8192]{0}', space=vmem, size = 0x2000, scoped, tag = 'output window, operand 0']
    #allocation4 [shape = 's32[2]{0}', space=sflag, size = 0x8, scoped, tag = 'scoped memory for tpu_custom_call.1']
    %10 = vsyncpa [#allocation4], 0
    %s11 = scalar_lea.sflag [#allocation4], 1
    %12 = vsyncpa %s11, 0
    loop: start=0, step=1, limit=8
    $region2: #{tpu_custom_call.1} parent=1 // loop_pre_header
      _
    $region3: #{tpu_custom_call.1} parent=1 // loop_header
      %s14 = sphi 0, %s18
      %p15 = scmp.ge.s32.totalorder %s14, 8
      %s21 = sphi 0, %s33
      %s22 = sphi 0, %s29
      %s23 = sphi 0, %s21
      %s24 = sphi 0, %s22
      %s25 = sphi 0, %s23
      %s26 = sphi 0, %s24
      %s40 = sphi 0, %s42
      %s43 = sphi 0, %s40
      %s44 = sphi 0, %s43
      %s60 = sphi 0, %s44
      %s70 = sphi 0, %s72
      %s73 = sphi 0, %s70
      %s74 = sphi 0, %s73
      %s90 = sphi 0, %s74
      %s100 = sphi 0, %s102
      %s103 = sphi 0, %s100
      %s104 = sphi 0, %s103
      %s120 = sphi 0, %s104
      %s124 = sphi 0, %s124
      %s126 = sphi 0, %s124
      %s127 = sphi 0, %s126
      %s141 = sphi 0, %s127
      %s145 = sphi 0, %s145
      %s147 = sphi 0, %s145
      %s148 = sphi 0, %s147
      %s162 = sphi 0, %s148
      %s168 = sphi 0, %s170
      %s171 = sphi 0, %s168
      %s172 = sphi 0, %s171
      %s188 = sphi 0, %s172
    $region4: #{tpu_custom_call.1} parent=1 // loop_header_branch
      %17 = sbr.rel (%p15) target = $region8
    $region5: #{tpu_custom_call.1} parent=1 // loop_body
      %s19 = ssub.s32 %s14, 1
      %s20 = ssub.s32 %s14, 2
      %s27 = sadd.s32 1, %s22
      %p28 = scmp.ge.s32.totalorder %s27, 3
      %s29 = scalar_select %p28, 0, %s27
      %s30 = sadd.s32 1, %s21
      %s31 = scalar_select %p28, %s30, %s21
      %p32 = scmp.ge.s32.totalorder %s31, 2
      %s33 = scalar_select %p32, 0, %s31
      %s34 = smul.u32 %s21, 3
      %s35 = sadd.s32 %s34, %s22
      %s36 = smul.u32 %s33, 3
      %s37 = sadd.s32 %s36, %s29
      %s38 = ssub.s32 %s35, %s37
      %p39 = scmp.eq.s32.totalorder %s38, 0
      %s41 = sadd.s32 %s40, 1
      %s42 = scalar_select %p39, %s40, %s41
      %p45 = pneg %p39
      %p46 = scmp.eq.s32.totalorder %s14, 5
      %p47 = por %p45, %p46
      %p48 = scmp.ne.s32.totalorder %s40, %s43
      %p49 = scmp.eq.s32.totalorder %s14, 0
      %p50 = por %p48, %p49
      %p51 = scmp.ne.s32.totalorder %s40, %s43
      %p52 = scmp.eq.s32.totalorder %s19, 5
      %p53 = por %p51, %p52
      %p54 = scmp.ne.s32.totalorder %s43, %s44
      %p55 = scmp.eq.s32.totalorder %s19, 0
      %p56 = por %p54, %p55
      %p57 = scmp.ne.s32.totalorder %s43, %s44
      %p58 = scmp.eq.s32.totalorder %s20, 5
      %p59 = por %p57, %p58
      %p61 = scmp.ne.s32.totalorder %s44, %s60
      %p62 = scmp.eq.s32.totalorder %s20, 0
      %p63 = por %p61, %p62
      %s64 = smul.u32 %s21, 3
      %s65 = sadd.s32 %s64, %s22
      %s66 = smul.u32 %s33, 3
      %s67 = sadd.s32 %s66, %s29
      %s68 = ssub.s32 %s65, %s67
      %p69 = scmp.eq.s32.totalorder %s68, 0
      %s71 = sadd.s32 %s70, 1
      %s72 = scalar_select %p69, %s70, %s71
      %p75 = pneg %p69
      %p76 = scmp.eq.s32.totalorder %s14, 5
      %p77 = por %p75, %p76
      %p78 = scmp.ne.s32.totalorder %s70, %s73
      %p79 = scmp.eq.s32.totalorder %s14, 0
      %p80 = por %p78, %p79
      %p81 = scmp.ne.s32.totalorder %s70, %s73
      %p82 = scmp.eq.s32.totalorder %s19, 5
      %p83 = por %p81, %p82
      %p84 = scmp.ne.s32.totalorder %s73, %s74
      %p85 = scmp.eq.s32.totalorder %s19, 0
      %p86 = por %p84, %p85
      %p87 = scmp.ne.s32.totalorder %s73, %s74
      %p88 = scmp.eq.s32.totalorder %s20, 5
      %p89 = por %p87, %p88
      %p91 = scmp.ne.s32.totalorder %s74, %s90
      %p92 = scmp.eq.s32.totalorder %s20, 0
      %p93 = por %p91, %p92
      %s94 = smul.u32 %s21, 3
      %s95 = sadd.s32 %s94, %s22
      %s96 = smul.u32 %s33, 3
      %s97 = sadd.s32 %s96, %s29
      %s98 = ssub.s32 %s95, %s97
      %p99 = scmp.eq.s32.totalorder %s98, 0
      %s101 = sadd.s32 %s100, 1
      %s102 = scalar_select %p99, %s100, %s101
      %p105 = pneg %p99
      %p106 = scmp.eq.s32.totalorder %s14, 5
      %p107 = por %p105, %p106
      %p108 = scmp.ne.s32.totalorder %s100, %s103
      %p109 = scmp.eq.s32.totalorder %s14, 0
      %p110 = por %p108, %p109
      %p111 = scmp.ne.s32.totalorder %s100, %s103
      %p112 = scmp.eq.s32.totalorder %s19, 5
      %p113 = por %p111, %p112
      %p114 = scmp.ne.s32.totalorder %s103, %s104
      %p115 = scmp.eq.s32.totalorder %s19, 0
      %p116 = por %p114, %p115
      %p117 = scmp.ne.s32.totalorder %s103, %s104
      %p118 = scmp.eq.s32.totalorder %s20, 5
      %p119 = por %p117, %p118
      %p121 = scmp.ne.s32.totalorder %s104, %s120
      %p122 = scmp.eq.s32.totalorder %s20, 0
      %p123 = por %p121, %p122
      %s125 = sadd.s32 %s124, 1
      %p128 = scmp.eq.s32.totalorder %s14, 5
      %p129 = scmp.ne.s32.totalorder %s124, %s126
      %p130 = scmp.eq.s32.totalorder %s14, 0
      %p131 = por %p129, %p130
      %p132 = scmp.ne.s32.totalorder %s124, %s126
      %p133 = scmp.eq.s32.totalorder %s19, 5
      %p134 = por %p132, %p133
      %p135 = scmp.ne.s32.totalorder %s126, %s127
      %p136 = scmp.eq.s32.totalorder %s19, 0
      %p137 = por %p135, %p136
      %p138 = scmp.ne.s32.totalorder %s126, %s127
      %p139 = scmp.eq.s32.totalorder %s20, 5
      %p140 = por %p138, %p139
      %p142 = scmp.ne.s32.totalorder %s127, %s141
      %p143 = scmp.eq.s32.totalorder %s20, 0
      %p144 = por %p142, %p143
      %s146 = sadd.s32 %s145, 1
      %p149 = scmp.eq.s32.totalorder %s14, 5
      %p150 = scmp.ne.s32.totalorder %s145, %s147
      %p151 = scmp.eq.s32.totalorder %s14, 0
      %p152 = por %p150, %p151
      %p153 = scmp.ne.s32.totalorder %s145, %s147
      %p154 = scmp.eq.s32.totalorder %s19, 5
      %p155 = por %p153, %p154
      %p156 = scmp.ne.s32.totalorder %s147, %s148
      %p157 = scmp.eq.s32.totalorder %s19, 0
      %p158 = por %p156, %p157
      %p159 = scmp.ne.s32.totalorder %s147, %s148
      %p160 = scmp.eq.s32.totalorder %s20, 5
      %p161 = por %p159, %p160
      %p163 = scmp.ne.s32.totalorder %s148, %s162
      %p164 = scmp.eq.s32.totalorder %s20, 0
      %p165 = por %p163, %p164
      %s166 = ssub.s32 %s21, %s33
      %p167 = scmp.eq.s32.totalorder %s166, 0
      %s169 = sadd.s32 %s168, 1
      %s170 = scalar_select %p167, %s168, %s169
      %p173 = pneg %p167
      %p174 = scmp.eq.s32.totalorder %s14, 5
      %p175 = por %p173, %p174
      %p176 = scmp.ne.s32.totalorder %s168, %s171
      %p177 = scmp.eq.s32.totalorder %s14, 0
      %p178 = por %p176, %p177
      %p179 = scmp.ne.s32.totalorder %s168, %s171
      %p180 = scmp.eq.s32.totalorder %s19, 5
      %p181 = por %p179, %p180
      %p182 = scmp.ne.s32.totalorder %s171, %s172
      %p183 = scmp.eq.s32.totalorder %s19, 0
      %p184 = por %p182, %p183
      %p185 = scmp.ne.s32.totalorder %s171, %s172
      %p186 = scmp.eq.s32.totalorder %s20, 5
      %p187 = por %p185, %p186
      %p189 = scmp.ne.s32.totalorder %s172, %s188
      %p190 = scmp.eq.s32.totalorder %s20, 0
      %p191 = por %p189, %p190
      %p192 = scmp.le.s32.totalorder 1, %s14
      %p193 = scmp.lt.s32.totalorder %s14, 7
      %p194 = pnand %p192, %p193
      %p195 = pneg %p194
      // Predicated region
      $region9: #{tpu_custom_call.1} parent=5 // pred_check
        _
      $region10: #{tpu_custom_call.1} parent=5 // pred_check_branch
        %197 = sbr.rel (%p194) target = $region12
      $region11: #{tpu_custom_call.1} parent=5 // pred_region
        %s198 = ssub.s32 %s14, 1
        // Predicated region
        $region13: #{tpu_custom_call.1} parent=11 // pred_check
          %p199 = pneg %p137
        $region14: #{tpu_custom_call.1} parent=11 // pred_check_branch
          %201 = sbr.rel (%p199) target = $region16
        $region15: #{tpu_custom_call.1} parent=11 // pred_region
          _
        $region16: #{tpu_custom_call.1} parent=11 // pred_fallthru
          _
        // Predicated region
        $region17: #{tpu_custom_call.1} parent=11 // pred_check
          %p202 = pneg %p158
        $region18: #{tpu_custom_call.1} parent=11 // pred_check_branch
          %204 = sbr.rel (%p202) target = $region20
        $region19: #{tpu_custom_call.1} parent=11 // pred_region
          _
        $region20: #{tpu_custom_call.1} parent=11 // pred_fallthru
          _
      $region12: #{tpu_custom_call.1} parent=5 // pred_fallthru
        _
      %p205 = scmp.lt.s32.totalorder %s14, 6
      // Predicated region
      $region21: #{tpu_custom_call.1} parent=5 // pred_check
        %p206 = pneg %p205
      $region22: #{tpu_custom_call.1} parent=5 // pred_check_branch
        %208 = sbr.rel (%p206) target = $region24
      $region23: #{tpu_custom_call.1} parent=5 // pred_region
        // Predicated region
        $region25: #{tpu_custom_call.1} parent=23 // pred_check
          %p209 = pneg %p50
        $region26: #{tpu_custom_call.1} parent=23 // pred_check_branch
          %211 = sbr.rel (%p209) target = $region28
        $region27: #{tpu_custom_call.1} parent=23 // pred_region
          %s212 = smul.u32 %s21, 3
          %s213 = sadd.s32 %s212, %s22
          %p214 = scmp.lt.s32.totalorder %s213, 5
          %s215 = scalar_select %p214, %s213, 5
          %s216 = smul.addr %s215, 8
          %s217 = scalar_lea.vmem %s0, %s216
          %s218 = smul.u32 %s21, 3
          %s219 = sadd.s32 %s218, %s22
        $region28: #{tpu_custom_call.1} parent=23 // pred_fallthru
          _
        // Predicated region
        $region29: #{tpu_custom_call.1} parent=23 // pred_check
          %p220 = pneg %p80
        $region30: #{tpu_custom_call.1} parent=23 // pred_check_branch
          %222 = sbr.rel (%p220) target = $region32
        $region31: #{tpu_custom_call.1} parent=23 // pred_region
          %s223 = smul.u32 %s21, 3
          %s224 = sadd.s32 %s223, %s22
          %p225 = scmp.lt.s32.totalorder %s224, 5
          %s226 = scalar_select %p225, %s224, 5
          %s227 = smul.addr %s226, 8
          %s228 = scalar_lea.vmem %s1, %s227
          %s229 = smul.u32 %s21, 3
          %s230 = sadd.s32 %s229, %s22
        $region32: #{tpu_custom_call.1} parent=23 // pred_fallthru
          _
        // Predicated region
        $region33: #{tpu_custom_call.1} parent=23 // pred_check
          %p231 = pneg %p110
        $region34: #{tpu_custom_call.1} parent=23 // pred_check_branch
          %233 = sbr.rel (%p231) target = $region36
        $region35: #{tpu_custom_call.1} parent=23 // pred_region
          %s234 = smul.u32 %s21, 3
          %s235 = sadd.s32 %s234, %s22
          %p236 = scmp.lt.s32.totalorder %s235, 5
          %s237 = scalar_select %p236, %s235, 5
          %s238 = smul.addr %s237, 8
          %s239 = scalar_lea.vmem %s2, %s238
          %s240 = smul.u32 %s21, 3
          %s241 = sadd.s32 %s240, %s22
        $region36: #{tpu_custom_call.1} parent=23 // pred_fallthru
          _
      $region24: #{tpu_custom_call.1} parent=5 // pred_fallthru
        _
      %p242 = scmp.le.s32.totalorder 1, %s14
      %p243 = scmp.lt.s32.totalorder %s14, 7
      %p244 = pnand %p242, %p243
      %p245 = pneg %p244
      // Predicated region
      $region37: #{tpu_custom_call.1} parent=5 // pred_check
        _
      $region38: #{tpu_custom_call.1} parent=5 // pred_check_branch
        %247 = sbr.rel (%p244) target = $region40
      $region39: #{tpu_custom_call.1} parent=5 // pred_region
        %s248 = ssub.s32 %s14, 1
        %s249 = smul.u32 %s23, 3
        %s250 = sadd.s32 %s249, %s24
        %p251 = scmp.lt.s32.totalorder %s250, 5
        %s252 = scalar_select %p251, %s250, 5
        %s253 = smul.addr %s252, 8
        %s254 = scalar_lea.vmem %s0, %s253
        %p255 = pneg %p56
        %p256 = pneg %p53
        %s257 = smul.u32 %s23, 3
        %s258 = sadd.s32 %s257, %s24
        %p259 = scmp.lt.s32.totalorder %s258, 5
        %s260 = scalar_select %p259, %s258, 5
        %s261 = smul.addr %s260, 8
        %s262 = scalar_lea.vmem %s1, %s261
        %p263 = pneg %p86
        %p264 = pneg %p83
        %s265 = smul.u32 %s23, 3
        %s266 = sadd.s32 %s265, %s24
        %p267 = scmp.lt.s32.totalorder %s266, 5
        %s268 = scalar_select %p267, %s266, 5
        %s269 = smul.addr %s268, 8
        %s270 = scalar_lea.vmem %s2, %s269
        %p271 = pneg %p116
        %p272 = pneg %p113
        %p273 = pneg %p137
        %p274 = pneg %p134
        %p275 = pneg %p158
        %p276 = pneg %p155
        %p277 = pneg %p184
        %p278 = pneg %p181
        %s279 = sand.u32 %s171, 1
        %s280 = scalar_lea.sflag [#allocation4], %s279
        %s281 = sand.u32 %s171, 1
        %s282 = smul.addr %s281, 8
        %s283 = scalar_lea.vmem [#allocation3], %s282
        %s284 = smul.u32 %s23, 3
        %s285 = sadd.s32 %s284, %s24
        %p286 = scmp.lt.s32.totalorder %s285, 5
        %s287 = scalar_select %p286, %s285, 5
        %s288 = smul.addr %s287, 8
        %s289 = scalar_lea.vmem %s0, %s288
        %s290 = smul.u32 %s23, 3
        %s291 = sadd.s32 %s290, %s24
        %s292 = smul.u32 %s23, 3
        %s293 = sadd.s32 %s292, %s24
        %p294 = scmp.lt.s32.totalorder %s293, 5
        %s295 = scalar_select %p294, %s293, 5
        %s296 = smul.addr %s295, 8
        %s297 = scalar_lea.vmem %s1, %s296
        %s298 = smul.u32 %s23, 3
        %s299 = sadd.s32 %s298, %s24
        %s300 = smul.u32 %s23, 3
        %s301 = sadd.s32 %s300, %s24
        %p302 = scmp.lt.s32.totalorder %s301, 5
        %s303 = scalar_select %p302, %s301, 5
        %s304 = smul.addr %s303, 8
        %s305 = scalar_lea.vmem %s2, %s304
        %s306 = smul.u32 %s23, 3
        %s307 = sadd.s32 %s306, %s24
        %p308 = scmp.eq.s32.totalorder %s24, 0
        // Predicated region
        $region41: #{tpu_custom_call.1} parent=39 // pred_check
          %p309 = pneg %p308
        $region42: #{tpu_custom_call.1} parent=39 // pred_check_branch
          %311 = sbr.rel (%p309) target = $region44
        $region43: #{tpu_custom_call.1} parent=39 // pred_region
          %vm312 = vcmask 7168
          %313 = vst.msk [vmem:[#allocation2] sm:$0xff] %vm312, 0.0
        $region44: #{tpu_custom_call.1} parent=39 // pred_fallthru
          _
        %v314 = vld [vmem:[%s289] sm:$0xff]
        %v315 = vld [vmem:[%s297] sm:$0xff]
        %v316 = vsub.f32 %v314, %v315
        %v317 = vand.u32 2147483647, %v316
        %v318 = vld [vmem:[%s3] sm:$0xff]
        %v319 = vld [vmem:[%s3 + $0x8] sm:$0xff]
        %v320 = vld [vmem:[%s3 + $0x10] sm:$0xff]
        %v321 = vld [vmem:[%s3 + $0x18] sm:$0xff]
        %v322 = vld [vmem:[%s3 + $0x20] sm:$0xff]
        %v323 = vld [vmem:[%s3 + $0x28] sm:$0xff]
        %v324 = vld [vmem:[%s3 + $0x30] sm:$0xff]
        %v325 = vld [vmem:[%s3 + $0x38] sm:$0xff]
        %s326 = scalar_lea.vmem %s3, 64
        %v327 = vld [vmem:[%s326] sm:$0xff]
        %v328 = vld [vmem:[%s326 + $0x8] sm:$0xff]
        %v329 = vld [vmem:[%s326 + $0x10] sm:$0xff]
        %v330 = vld [vmem:[%s326 + $0x18] sm:$0xff]
        %v331 = vld [vmem:[%s326 + $0x20] sm:$0xff]
        %v332 = vld [vmem:[%s326 + $0x28] sm:$0xff]
        %v333 = vld [vmem:[%s326 + $0x30] sm:$0xff]
        %v334 = vld [vmem:[%s326 + $0x38] sm:$0xff]
        %vm335 = vcmask 523264
        %v337 = vsel %vm335, %v315, 0
        %339 = vmatprep.subr.mxu0 0.0
        %340 = vmatpush1.msra.mxu0 0.0
        %341 = vmatprep.subr.mxu0 0.0
        %342 = vmatpush1.msra.mxu0 0.0
        %343 = vmatprep.subr.mxu0 0.0
        %344 = vmatpush1.msra.mxu0 0.0
        %345 = vmatprep.subr.mxu0 0.0
        %346 = vmatpush1.msra.mxu0 0.0
        %347 = vmatprep.subr.mxu0 0.0
        %348 = vmatpush1.msra.mxu0 0.0
        %349 = vmatprep.subr.mxu0 0.0
        %350 = vmatpush1.msra.mxu0 0.0
        %351 = vmatprep.subr.mxu0 0.0
        %352 = vmatpush1.msra.mxu0 0.0
        %353 = vmatprep.subr.mxu0 0.0
        %354 = vmatpush1.msra.mxu0 0.0
        %355 = vmatprep.subr.mxu0 0.0
        %356 = vmatpush1.msra.mxu0 %v334
        %357 = vmatprep.subr.mxu0 0.0
        %358 = vmatpush1.msra.mxu0 %v333
        %359 = vmatprep.subr.mxu0 0.0
        %360 = vmatpush1.msra.mxu0 %v332
        %361 = vmatprep.subr.mxu0 0.0
        %362 = vmatpush1.msra.mxu0 %v331
        %363 = vmatprep.subr.mxu0 0.0
        %364 = vmatpush1.msra.mxu0 %v330
        %365 = vmatprep.subr.mxu0 0.0
        %366 = vmatpush1.msra.mxu0 %v329
        %367 = vmatprep.subr.mxu0 0.0
        %368 = vmatpush1.msra.mxu0 %v328
        %369 = vmatprep.subr.mxu0 0.0
        %370 = vmatpush1.msra.mxu0 %v327
        %371 = vmatprep.subr.mxu0 0.0
        %372 = vmatpush2.msra.mxu0 0.0
        %373 = vmatprep.subr.mxu0 0.0
        %374 = vmatpush2.msra.mxu0 0.0
        %375 = vmatprep.subr.mxu0 0.0
        %376 = vmatpush2.msra.mxu0 0.0
        %377 = vmatprep.subr.mxu0 0.0
        %378 = vmatpush2.msra.mxu0 0.0
        %379 = vmatprep.subr.mxu0 0.0
        %380 = vmatpush2.msra.mxu0 0.0
        %381 = vmatprep.subr.mxu0 0.0
        %382 = vmatpush2.msra.mxu0 0.0
        %383 = vmatprep.subr.mxu0 0.0
        %384 = vmatpush2.msra.mxu0 0.0
        %385 = vmatprep.subr.mxu0 0.0
        %386 = vmatpush2.msra.mxu0 0.0
        %387 = vmatprep.subr.mxu0 0.0
        %388 = vmatpush2.msra.mxu0 0.0
        %389 = vmatprep.subr.mxu0 0.0
        %390 = vmatpush2.msra.mxu0 0.0
        %391 = vmatprep.subr.mxu0 0.0
        %392 = vmatpush2.msra.mxu0 0.0
        %393 = vmatprep.subr.mxu0 0.0
        %394 = vmatpush2.msra.mxu0 0.0
        %395 = vmatprep.subr.mxu0 0.0
        %396 = vmatpush2.msra.mxu0 0.0
        %397 = vmatprep.subr.mxu0 0.0
        %398 = vmatpush2.msra.mxu0 0.0
        %399 = vmatprep.subr.mxu0 0.0
        %400 = vmatpush2.msra.mxu0 0.0
        %401 = vmatprep.subr.mxu0 0.0
        %402 = vmatpush2.msra.mxu0 0.0
        %403 = vmatprep.mubr.f32.mxu0 0.0
        %404 = vmatmul.mubr.f32.gmra.mxu0 %v337
        %v405 = vpop.f32.mrf.mxu0
        %v406 = vadd.f32 0.0, %v405
        %v407 = vpop.f32.mrf.mxu0
        %408 = vdwg.mxu0
        %v410 = vsel %vm335, %v314, 0
        %412 = vmatprep.subr.mxu0 0.0
        %413 = vmatpush1.msra.mxu0 0.0
        %414 = vmatprep.subr.mxu0 0.0
        %415 = vmatpush1.msra.mxu0 0.0
        %416 = vmatprep.subr.mxu0 0.0
        %417 = vmatpush1.msra.mxu0 0.0
        %418 = vmatprep.subr.mxu0 0.0
        %419 = vmatpush1.msra.mxu0 0.0
        %420 = vmatprep.subr.mxu0 0.0
        %421 = vmatpush1.msra.mxu0 0.0
        %422 = vmatprep.subr.mxu0 0.0
        %423 = vmatpush1.msra.mxu0 0.0
        %424 = vmatprep.subr.mxu0 0.0
        %425 = vmatpush1.msra.mxu0 0.0
        %426 = vmatprep.subr.mxu0 0.0
        %427 = vmatpush1.msra.mxu0 0.0
        %428 = vmatprep.subr.mxu0 0.0
        %429 = vmatpush1.msra.mxu0 %v325
        %430 = vmatprep.subr.mxu0 0.0
        %431 = vmatpush1.msra.mxu0 %v324
        %432 = vmatprep.subr.mxu0 0.0
        %433 = vmatpush1.msra.mxu0 %v323
        %434 = vmatprep.subr.mxu0 0.0
        %435 = vmatpush1.msra.mxu0 %v322
        %436 = vmatprep.subr.mxu0 0.0
        %437 = vmatpush1.msra.mxu0 %v321
        %438 = vmatprep.subr.mxu0 0.0
        %439 = vmatpush1.msra.mxu0 %v320
        %440 = vmatprep.subr.mxu0 0.0
        %441 = vmatpush1.msra.mxu0 %v319
        %442 = vmatprep.subr.mxu0 0.0
        %443 = vmatpush1.msra.mxu0 %v318
        %444 = vmatprep.subr.mxu0 0.0
        %445 = vmatpush2.msra.mxu0 0.0
        %446 = vmatprep.subr.mxu0 0.0
        %447 = vmatpush2.msra.mxu0 0.0
        %448 = vmatprep.subr.mxu0 0.0
        %449 = vmatpush2.msra.mxu0 0.0
        %450 = vmatprep.subr.mxu0 0.0
        %451 = vmatpush2.msra.mxu0 0.0
        %452 = vmatprep.subr.mxu0 0.0
        %453 = vmatpush2.msra.mxu0 0.0
        %454 = vmatprep.subr.mxu0 0.0
        %455 = vmatpush2.msra.mxu0 0.0
        %456 = vmatprep.subr.mxu0 0.0
        %457 = vmatpush2.msra.mxu0 0.0
        %458 = vmatprep.subr.mxu0 0.0
        %459 = vmatpush2.msra.mxu0 0.0
        %460 = vmatprep.subr.mxu0 0.0
        %461 = vmatpush2.msra.mxu0 0.0
        %462 = vmatprep.subr.mxu0 0.0
        %463 = vmatpush2.msra.mxu0 0.0
        %464 = vmatprep.subr.mxu0 0.0
        %465 = vmatpush2.msra.mxu0 0.0
        %466 = vmatprep.subr.mxu0 0.0
        %467 = vmatpush2.msra.mxu0 0.0
        %468 = vmatprep.subr.mxu0 0.0
        %469 = vmatpush2.msra.mxu0 0.0
        %470 = vmatprep.subr.mxu0 0.0
        %471 = vmatpush2.msra.mxu0 0.0
        %472 = vmatprep.subr.mxu0 0.0
        %473 = vmatpush2.msra.mxu0 0.0
        %474 = vmatprep.subr.mxu0 0.0
        %475 = vmatpush2.msra.mxu0 0.0
        %476 = vmatprep.mubr.f32.mxu0 0.0
        %477 = vmatmul.mubr.f32.gmra.mxu0 %v410
        %v478 = vpop.f32.mrf.mxu0
        %v479 = vadd.f32 %v406, %v478
        %v480 = vpop.f32.mrf.mxu0
        %481 = vdwg.mxu0
        %s482 = scalar_lea.vmem %s3, 128
        %v483 = vld [vmem:[%s482] sm:$0xff]
        %v484 = vld [vmem:[%s482 + $0x8] sm:$0xff]
        %v485 = vld [vmem:[%s482 + $0x10] sm:$0xff]
        %v486 = vld [vmem:[%s482 + $0x18] sm:$0xff]
        %v487 = vld [vmem:[%s482 + $0x20] sm:$0xff]
        %v488 = vld [vmem:[%s482 + $0x28] sm:$0xff]
        %v489 = vld [vmem:[%s482 + $0x30] sm:$0xff]
        %v490 = vld [vmem:[%s482 + $0x38] sm:$0xff]
        %v492 = vsel %vm335, %v317, 0
        %494 = vmatprep.subr.mxu0 0.0
        %495 = vmatpush1.msra.mxu0 0.0
        %496 = vmatprep.subr.mxu0 0.0
        %497 = vmatpush1.msra.mxu0 0.0
        %498 = vmatprep.subr.mxu0 0.0
        %499 = vmatpush1.msra.mxu0 0.0
        %500 = vmatprep.subr.mxu0 0.0
        %501 = vmatpush1.msra.mxu0 0.0
        %502 = vmatprep.subr.mxu0 0.0
        %503 = vmatpush1.msra.mxu0 0.0
        %504 = vmatprep.subr.mxu0 0.0
        %505 = vmatpush1.msra.mxu0 0.0
        %506 = vmatprep.subr.mxu0 0.0
        %507 = vmatpush1.msra.mxu0 0.0
        %508 = vmatprep.subr.mxu0 0.0
        %509 = vmatpush1.msra.mxu0 0.0
        %510 = vmatprep.subr.mxu0 0.0
        %511 = vmatpush1.msra.mxu0 %v490
        %512 = vmatprep.subr.mxu0 0.0
        %513 = vmatpush1.msra.mxu0 %v489
        %514 = vmatprep.subr.mxu0 0.0
        %515 = vmatpush1.msra.mxu0 %v488
        %516 = vmatprep.subr.mxu0 0.0
        %517 = vmatpush1.msra.mxu0 %v487
        %518 = vmatprep.subr.mxu0 0.0
        %519 = vmatpush1.msra.mxu0 %v486
        %520 = vmatprep.subr.mxu0 0.0
        %521 = vmatpush1.msra.mxu0 %v485
        %522 = vmatprep.subr.mxu0 0.0
        %523 = vmatpush1.msra.mxu0 %v484
        %524 = vmatprep.subr.mxu0 0.0
        %525 = vmatpush1.msra.mxu0 %v483
        %526 = vmatprep.subr.mxu0 0.0
        %527 = vmatpush2.msra.mxu0 0.0
        %528 = vmatprep.subr.mxu0 0.0
        %529 = vmatpush2.msra.mxu0 0.0
        %530 = vmatprep.subr.mxu0 0.0
        %531 = vmatpush2.msra.mxu0 0.0
        %532 = vmatprep.subr.mxu0 0.0
        %533 = vmatpush2.msra.mxu0 0.0
        %534 = vmatprep.subr.mxu0 0.0
        %535 = vmatpush2.msra.mxu0 0.0
        %536 = vmatprep.subr.mxu0 0.0
        %537 = vmatpush2.msra.mxu0 0.0
        %538 = vmatprep.subr.mxu0 0.0
        %539 = vmatpush2.msra.mxu0 0.0
        %540 = vmatprep.subr.mxu0 0.0
        %541 = vmatpush2.msra.mxu0 0.0
        %542 = vmatprep.subr.mxu0 0.0
        %543 = vmatpush2.msra.mxu0 0.0
        %544 = vmatprep.subr.mxu0 0.0
        %545 = vmatpush2.msra.mxu0 0.0
        %546 = vmatprep.subr.mxu0 0.0
        %547 = vmatpush2.msra.mxu0 0.0
        %548 = vmatprep.subr.mxu0 0.0
        %549 = vmatpush2.msra.mxu0 0.0
        %550 = vmatprep.subr.mxu0 0.0
        %551 = vmatpush2.msra.mxu0 0.0
        %552 = vmatprep.subr.mxu0 0.0
        %553 = vmatpush2.msra.mxu0 0.0
        %554 = vmatprep.subr.mxu0 0.0
        %555 = vmatpush2.msra.mxu0 0.0
        %556 = vmatprep.subr.mxu0 0.0
        %557 = vmatpush2.msra.mxu0 0.0
        %558 = vmatprep.mubr.f32.mxu0 0.0
        %559 = vmatmul.mubr.f32.gmra.mxu0 %v492
        %v560 = vpop.f32.mrf.mxu0
        %v561 = vadd.f32 0.0, %v560
        %v562 = vpop.f32.mrf.mxu0
        %563 = vdwg.mxu0
        %v564 = vadd.f32 %v479, %v561
        %v565 = vld [vmem:[%s4] sm:$0x1]
        %v567 = vlaneseq
        %v568 = vshrl.u32 %v567, 7
        %v569 = vsub.s32 0, %v568
        %v570 = vrot.slane %v565, %v569
        %v572 = vadd.f32 %v564, %v570
        %vm573 = vcmask 23552
        %v574 = vsel %vm573, %v572, -inf
        %575 = vmax.xlane.f32.xlu0 %v574
        %v576 = vpop.xlane.xlu0 %575
        %v577 = vsub.f32 %v572, %v576
        %v578 = vmul.f32 %v577, 1.442695
        %v579 = vpow.pop %v578
        %v580 = vsel %vm573, %v579, 0.0
        %581 = vadd.xlane.f32.xlu0 %v580
        %v582 = vpop.xlane.xlu0 %581
        %v583 = vlog2.pop %v582
        %v584 = vmul.f32 %v583, 0.6931472
        %v585 = vadd.f32 %v576, %v584
        %v586 = vld [vmem:[%s305] sm:$0xff]
        %v587 = vlaneseq
        %v588 = vand.u32 %v587, 127
        %589 = vset.pattern.permute.xlu0 0
        %590 = vperm.xlu0 %589, %v586
        %v591 = vpop.permute.xlu0 %590
        %vm592 = vcmp.eq.s32.totalorder %v588, %v591
        %v593 = vsel %vm592, %v572, 0.0
        %v594 = vsel %vm573, %v593, 0.0
        %595 = vadd.xlane.f32.xlu0 %v594
        %v596 = vpop.xlane.xlu0 %595
        %v597 = vsub.f32 %v585, %v596
        %s598 = smul.u32 %s23, 3
        %s599 = sadd.s32 %s598, %s24
        %s600 = smul.u32 %s599, 8
        %v601 = vlaneseq
        %v602 = vshrl.u32 %v601, 7
        %v603 = vstv %s600
        %v604 = vadd.s32 %v603, %v602
        %vm605 = vcmp.lt.s32.totalorder %v604, 40
        %v606 = vsel %vm605, %v597, 0.0
        %v607 = vld [vmem:[#allocation2] sm:$0xff]
        %v608 = vadd.f32 %v607, %v606
        %vm609 = vcmask 7168
        %610 = vst.msk [vmem:[#allocation2] sm:$0xff] %vm609, %v608
        %p611 = scmp.eq.s32.totalorder %s24, 2
        // Predicated region
        $region45: #{tpu_custom_call.1} parent=39 // pred_check
          %p612 = pneg %p611
        $region46: #{tpu_custom_call.1} parent=39 // pred_check_branch
          %614 = sbr.rel (%p612) target = $region48
        $region47: #{tpu_custom_call.1} parent=39 // pred_region
          %v615 = vld [vmem:[#allocation2] sm:$0xff]
          %v616 = vsel %vm609, %v615, 0.0
          %617 = vadd.xlane.f32.xlu0 %v616
          %v618 = vpop.xlane.xlu0 %617
          %v619 = vrot.slane %v618, 4
          %v620 = vadd.f32 %v618, %v619
          %v621 = vrot.slane %v620, 2
          %v622 = vadd.f32 %v620, %v621
          %v623 = vrot.slane %v622, 1
          %v624 = vadd.f32 %v622, %v623
          %s625 = vtos %v624
          %v626 = vstv %s625
          %v627 = vadd.f32 %v626, 0.0
          %628 = vst [vmem:[%s283] sm:$0xff] %v627
        $region48: #{tpu_custom_call.1} parent=39 // pred_fallthru
          _
        %s629 = sand.u32 %s171, 1
        %s630 = scalar_lea.sflag [#allocation4], %s629
        %s631 = sand.u32 %s171, 1
        %s632 = smul.addr %s631, 8
        %s633 = scalar_lea.vmem [#allocation3], %s632
        // Predicated region
        $region49: #{tpu_custom_call.1} parent=39 // pred_check
          %p634 = pneg %p181
        $region50: #{tpu_custom_call.1} parent=39 // pred_check_branch
          %636 = sbr.rel (%p634) target = $region52
        $region51: #{tpu_custom_call.1} parent=39 // pred_region
          %s638 = ssub.s32 128, 128
          %639 = vsyncadd %s630, %s638
          %s640 = smul.addr %s23, 128
          %s641 = scalar_lea.hbm %s5, %s640
          %s643 = sshll.u32 %s633, 4
          %s644 = int_to_ptr.vmem [resolvable:$true] %s643
          %646 = dma.vmem_to_hbm [thread:$0]  %s644, 128, %s641, %s630
        $region52: #{tpu_custom_call.1} parent=39 // pred_fallthru
          _
      $region40: #{tpu_custom_call.1} parent=5 // pred_fallthru
        _
      %p647 = scmp.le.s32.totalorder 2, %s14
      // Predicated region
      $region53: #{tpu_custom_call.1} parent=5 // pred_check
        %p648 = pneg %p647
      $region54: #{tpu_custom_call.1} parent=5 // pred_check_branch
        %650 = sbr.rel (%p648) target = $region56
      $region55: #{tpu_custom_call.1} parent=5 // pred_region
        %s651 = ssub.s32 %s14, 2
        // Predicated region
        $region57: #{tpu_custom_call.1} parent=55 // pred_check
          %p652 = pneg %p187
        $region58: #{tpu_custom_call.1} parent=55 // pred_check_branch
          %654 = sbr.rel (%p652) target = $region60
        $region59: #{tpu_custom_call.1} parent=55 // pred_region
          %s655 = sand.u32 %s172, 1
          %s656 = scalar_lea.sflag [#allocation4], %s655
          %s657 = sand.u32 %s172, 1
          %s658 = smul.addr %s657, 8
          %s659 = scalar_lea.vmem [#allocation3], %s658
          %660 = dma.done %s656, 128
        $region60: #{tpu_custom_call.1} parent=55 // pred_fallthru
          _
      $region56: #{tpu_custom_call.1} parent=5 // pred_fallthru
        _
    $region6: #{tpu_custom_call.1} parent=1 // loop_footer
      %s18 = sadd.s32 1, %s14
    $region7: #{tpu_custom_call.1} parent=1 // loop_footer_branch
      %13 = sbr.rel target = $region3
    $region8: #{tpu_custom_call.1} parent=1 // loop_exit
      _
    %661 = vsyncpa [#allocation4], 1
    %s662 = scalar_lea.sflag [#allocation4], 1
    %663 = vsyncpa %s662, 1

</llo_original>
